<compile_context>
chip_gen: v6e
topology: v6e:2x2x1
jax: 0.10.0
libtpu: 0.0.40
codegen_flags: <defaults>
</compile_context>

<pallas_src>
import functools
import math

import jax
import jax.numpy as jnp
from jax import lax
from jax.experimental import pallas as pl
from jax.experimental.pallas import tpu as pltpu


def _pick_tile(n: int, cap: int) -> int:
    """Largest divisor of n that is <= cap (n itself if n <= cap)."""
    if n <= cap:
        return n
    for t in range(cap, 0, -1):
        if n % t == 0:
            return t
    return n


# ---------------------------------------------------------------------------
# Kernel 1: fused per-(batch, head, T-tile) QKV projection.
#   x_tile [tT, H] @ w_head [H, 3d] + b  ->  q/k/v [tT, d]
# The 1/sqrt(d) scale is already folded into the query columns of w/b.
# ---------------------------------------------------------------------------
def _qkv_proj_kernel(x_ref, w_ref, b_ref, q_ref, k_ref, v_ref, *, head_dim):
    x = x_ref[...]                        # [tT, H]   network dtype (MXU input)
    w = w_ref[...]                        # [H, 3d]   pre-transposed, head-sliced
    qkv = jnp.dot(x, w, preferred_element_type=jnp.float32) + b_ref[...]  # [tT, 3d]
    d = head_dim
    q_ref[...] = qkv[:, 0 * d:1 * d].astype(q_ref.dtype)
    k_ref[...] = qkv[:, 1 * d:2 * d].astype(k_ref.dtype)
    v_ref[...] = qkv[:, 2 * d:3 * d].astype(v_ref.dtype)


# ---------------------------------------------------------------------------
# Kernel 2: flash-style attention, one (batch, head, q_tile) accumulator,
#           online softmax over kv tiles (last grid axis, "arbitrary").
# ---------------------------------------------------------------------------
def _flash_attn_kernel(q_ref, k_ref, v_ref, o_ref, m_sc, l_sc, acc_sc):
    kv = pl.program_id(3)

    @pl.when(kv == 0)
    def _():
        m_sc[...] = jnp.full_like(m_sc, -jnp.inf)
        l_sc[...] = jnp.zeros_like(l_sc)
        acc_sc[...] = jnp.zeros_like(acc_sc)

    q = q_ref[...]                        # [tq, d]  (already scaled by 1/sqrt(d))
    k = k_ref[...]                        # [tkv, d]
    v = v_ref[...]                        # [tkv, d]

    # scores = q @ k.T without materializing a transpose (contract dim 1 vs 1).
    s = lax.dot_general(q, k, (((1,), (1,)), ((), ())),
                        preferred_element_type=jnp.float32)           # [tq, tkv]

    m_prev = m_sc[...]
    m_new = jnp.maximum(m_prev, s.max(axis=-1, keepdims=True))
    alpha = jnp.exp(m_prev - m_new)
    p = jnp.exp(s - m_new)                                             # f32 stats
    l_sc[...] = alpha * l_sc[...] + p.sum(axis=-1, keepdims=True)
    acc_sc[...] = alpha * acc_sc[...] + jnp.dot(
        p.astype(v.dtype), v, preferred_element_type=jnp.float32)
    m_sc[...] = m_new

    @pl.when(kv == pl.num_programs(3) - 1)
    def _():
        inv_l = pl.reciprocal(l_sc[...], approx=False)   # exact; once per q tile
        o_ref[...] = (acc_sc[...] * inv_l).astype(o_ref.dtype)


# ---------------------------------------------------------------------------
# Wrapper
# ---------------------------------------------------------------------------
def self_attention(hidden_states, wq, bq, wk, bk, wv, bv, *, num_heads: int):
    """hidden_states: [B, T, H]; nn.Linear weights [H, H] (out, in); biases [H]."""
    B, T, H = hidden_states.shape
    assert H % num_heads == 0
    d = H // num_heads
    scale = 1.0 / math.sqrt(d)
    dtype = hidden_states.dtype

    # One-time weight prep (outside the kernel: no in-kernel transposes).
    # Fold 1/sqrt(d) into the query projection (free, wrapper-side), then
    # pre-transpose nn.Linear weights (x @ W.T + b) and slice per head;
    # concatenate Q/K/V columns -> [num_heads, H, 3d].
    wq_s = wq * scale
    bq_s = bq * scale

    def per_head(w):
        return jnp.transpose(w.astype(dtype)).reshape(H, num_heads, d).transpose(1, 0, 2)

    w_fused = jnp.concatenate([per_head(wq_s), per_head(wk), per_head(wv)], axis=-1)
    b_fused = jnp.concatenate(
        [bq_s.reshape(num_heads, 1, d),
         bk.reshape(num_heads, 1, d),
         bv.reshape(num_heads, 1, d)], axis=-1).astype(jnp.float32)    # [nh, 1, 3d]

    # ---- Kernel 1: fused QKV projection over (batch, head, T-tile) ----------
    # T-tile axis is innermost so the per-head weight block stays VMEM-resident
    # while x tiles / q-k-v writebacks are double-buffered.
    tT = _pick_tile(T, 256)
    qkv_kernel = functools.partial(_qkv_proj_kernel, head_dim=d)
    head_shape = jax.ShapeDtypeStruct((B, num_heads, T, d), dtype)
    q, k, v = pl.pallas_call(
        qkv_kernel,
        out_shape=(head_shape, head_shape, head_shape),
        grid_spec=pltpu.PrefetchScalarGridSpec(
            num_scalar_prefetch=0,
            grid=(B, num_heads, T // tT),
            in_specs=[
                pl.BlockSpec((None, tT, H), lambda b, h, ti: (b, ti, 0)),
                pl.BlockSpec((None, H, 3 * d), lambda b, h, ti: (h, 0, 0)),
                pl.BlockSpec((None, 1, 3 * d), lambda b, h, ti: (h, 0, 0)),
            ],
            out_specs=(
                pl.BlockSpec((None, None, tT, d), lambda b, h, ti: (b, h, ti, 0)),
                pl.BlockSpec((None, None, tT, d), lambda b, h, ti: (b, h, ti, 0)),
                pl.BlockSpec((None, None, tT, d), lambda b, h, ti: (b, h, ti, 0)),
            ),
        ),
        compiler_params=pltpu.CompilerParams(
            dimension_semantics=("parallel", "parallel", "parallel")),
    )(hidden_states, w_fused, b_fused)

    # ---- Kernel 2: tiled flash attention over (batch, head, q_tile, kv_tile) -
    # tq<=256 / tkv<=512 per the review: per-step VMEM (double-buffered q/k/v/o
    # + f32 m/l/acc + [tq,tkv] score tile) is only a few MB, far under the
    # scoped-VMEM default on v5e/v6e/v7x, while cutting grid-step overhead and
    # K/V HBM re-reads.
    tq = _pick_tile(T, 256)
    tkv = _pick_tile(T, 512)

    grid = (B, num_heads, T // tq, T // tkv)
    in_specs = [
        pl.BlockSpec((None, None, tq, d), lambda b, h, qi, ki: (b, h, qi, 0)),
        pl.BlockSpec((None, None, tkv, d), lambda b, h, qi, ki: (b, h, ki, 0)),
        pl.BlockSpec((None, None, tkv, d), lambda b, h, qi, ki: (b, h, ki, 0)),
    ]
    scratch_shapes = [
        pltpu.VMEM((tq, 1), jnp.float32),   # running max m
        pltpu.VMEM((tq, 1), jnp.float32),   # running sum l
        pltpu.VMEM((tq, d), jnp.float32),   # f32 accumulator
    ]
    compiler_params = pltpu.CompilerParams(
        dimension_semantics=("parallel", "parallel", "parallel", "arbitrary"))

    if d % 128 == 0:
        # Lane-aligned head dim: write each head's context directly into its
        # column block of the merged [B, T, H] output (lane-dense, unmasked
        # stores) and skip the wrapper head-merge transpose entirely.
        return pl.pallas_call(
            _flash_attn_kernel,
            out_shape=jax.ShapeDtypeStruct((B, T, H), dtype),
            grid_spec=pltpu.PrefetchScalarGridSpec(
                num_scalar_prefetch=0,
                grid=grid,
                in_specs=in_specs,
                out_specs=pl.BlockSpec((None, tq, d),
                                       lambda b, h, qi, ki: (b, qi, h)),
                scratch_shapes=scratch_shapes,
            ),
            compiler_params=compiler_params,
        )(q, k, v)

    # Fallback for d % 128 != 0: per-head output layout (block last dims equal
    # full array dims), head merge done wrapper-side.
    ctx = pl.pallas_call(
        _flash_attn_kernel,
        out_shape=jax.ShapeDtypeStruct((B, num_heads, T, d), dtype),
        grid_spec=pltpu.PrefetchScalarGridSpec(
            num_scalar_prefetch=0,
            grid=grid,
            in_specs=in_specs,
            out_specs=pl.BlockSpec((None, None, tq, d),
                                   lambda b, h, qi, ki: (b, h, qi, 0)),
            scratch_shapes=scratch_shapes,
        ),
        compiler_params=compiler_params,
    )(q, k, v)
    return ctx.transpose(0, 2, 1, 3).reshape(B, T, H)


# ---------------------------------------------------------------------------
# Pure-JAX reference mirroring the PyTorch forward (eval mode).
# ---------------------------------------------------------------------------
def self_attention_reference(hidden_states, wq, bq, wk, bk, wv, bv, *, num_heads):
    B, T, H = hidden_states.shape
    head_dim = H // num_heads
    x = hidden_states.astype(jnp.float32)

    def proj(w, b):
        y = x @ w.T + b
        return y.reshape(B, T, num_heads, head_dim).transpose(0, 2, 1, 3)

    q = proj(wq, bq)
    k = proj(wk, bk)
    v = proj(wv, bv)
    scores = jnp.einsum("bhtd,bhsd->bhts", q, k) / math.sqrt(head_dim)
    probs = jax.nn.softmax(scores, axis=-1)
    ctx = jnp.einsum("bhts,bhsd->bhtd", probs, v)
    ctx = ctx.transpose(0, 2, 1, 3).reshape(B, T, H)
    return ctx.astype(hidden_states.dtype)


def _run_case(key, B, T, H, num_heads, atol, rtol):
    k_x, k_wq, k_wk, k_wv, k_bq, k_bk, k_bv = jax.random.split(key, 7)
    hidden_states = jax.random.normal(k_x, (B, T, H), dtype=jnp.float32)
    init_scale = 1.0 / math.sqrt(H)
    wq = jax.random.uniform(k_wq, (H, H), jnp.float32, -init_scale, init_scale)
    wk = jax.random.uniform(k_wk, (H, H), jnp.float32, -init_scale, init_scale)
    wv = jax.random.uniform(k_wv, (H, H), jnp.float32, -init_scale, init_scale)
    bq = jax.random.uniform(k_bq, (H,), jnp.float32, -init_scale, init_scale)
    bk = jax.random.uniform(k_bk, (H,), jnp.float32, -init_scale, init_scale)
    bv = jax.random.uniform(k_bv, (H,), jnp.float32, -init_scale, init_scale)

    out = self_attention(hidden_states, wq, bq, wk, bk, wv, bv, num_heads=num_heads)
    out = jax.block_until_ready(out)
    ref = self_attention_reference(hidden_states, wq, bq, wk, bk, wv, bv,
                                   num_heads=num_heads)
    assert out.shape == (B, T, H)
    assert jnp.allclose(out, ref, atol=atol, rtol=rtol), (
        f"mismatch vs reference at B={B}, T={T}, H={H}, nh={num_heads}")


if __name__ == "__main__":
    key = jax.random.PRNGKey(0)
    k1, k2 = jax.random.split(key, 2)

    # Small config consistent with the module: hidden_size=32, num_heads=4
    # (head_dim=8 -> per-head output layout + wrapper head merge).
    _run_case(k1, B=2, T=8, H=32, num_heads=4, atol=2e-4, rtol=2e-4)

    # Lane-aligned config (head_dim=128): exercises the large flash tiles
    # (tq=256, tkv=512, multiple kv steps / online softmax) and the direct
    # lane-dense [B, T, H] writeback path with no wrapper transpose.
    _run_case(k2, B=1, T=1024, H=256, num_heads=2, atol=2e-4, rtol=2e-4)

    print("KERNEL_OK")
</pallas_src>

<mosaic_0001>
module attributes {stable_mosaic.version = 11 : i64} {
  func.func @_qkv_proj_kernel(%arg0: i32, %arg1: i32, %arg2: i32, %arg3: memref<1x8x32xf32, #tpu.memory_space<vmem>>, %arg4: memref<1x32x24xf32, #tpu.memory_space<vmem>>, %arg5: memref<1x1x24xf32, #tpu.memory_space<vmem>>, %arg6: memref<1x1x8x8xf32, #tpu.memory_space<vmem>>, %arg7: memref<1x1x8x8xf32, #tpu.memory_space<vmem>>, %arg8: memref<1x1x8x8xf32, #tpu.memory_space<vmem>>) attributes {dimension_semantics = [#tpu.dimension_semantics<parallel>, #tpu.dimension_semantics<parallel>, #tpu.dimension_semantics<parallel>], iteration_bounds = array<i64: 2, 4, 1>, scalar_prefetch = 0 : i64, scratch_operands = 0 : i64, tpu.core_type = #tpu.core_type<tc>, window_params = [{transform_indices = @transform_0, window_bounds = array<i64: 1, 8, 32>}, {transform_indices = @transform_1, window_bounds = array<i64: 1, 32, 24>}, {transform_indices = @transform_2, window_bounds = array<i64: 1, 1, 24>}, {transform_indices = @transform_3, window_bounds = array<i64: 1, 1, 8, 8>}, {transform_indices = @transform_4, window_bounds = array<i64: 1, 1, 8, 8>}, {transform_indices = @transform_5, window_bounds = array<i64: 1, 1, 8, 8>}]} {
    %c0 = arith.constant 0 : index
    %c0_0 = arith.constant 0 : index
    %c0_1 = arith.constant 0 : index
    %0 = vector.load %arg3[%c0, %c0_0, %c0_1] : memref<1x8x32xf32, #tpu.memory_space<vmem>>, vector<1x8x32xf32>
    %1 = vector.shape_cast %0 : vector<1x8x32xf32> to vector<8x32xf32>
    %c0_2 = arith.constant 0 : index
    %c0_3 = arith.constant 0 : index
    %c0_4 = arith.constant 0 : index
    %2 = vector.load %arg4[%c0_2, %c0_3, %c0_4] : memref<1x32x24xf32, #tpu.memory_space<vmem>>, vector<1x32x24xf32>
    %3 = vector.shape_cast %2 : vector<1x32x24xf32> to vector<32x24xf32>
    %cst = arith.constant dense<0.000000e+00> : vector<8x24xf32>
    %4 = tpu.matmul %1, %3, %cst {dimension_numbers = #tpu.dot_dimension_numbers<[1], [0], [0], [1], [0, 0, 1, 1], [], []>} : vector<8x32xf32>, vector<32x24xf32>, vector<8x24xf32> -> vector<8x24xf32>
    %c0_5 = arith.constant 0 : index
    %c0_6 = arith.constant 0 : index
    %c0_7 = arith.constant 0 : index
    %5 = vector.load %arg5[%c0_5, %c0_6, %c0_7] : memref<1x1x24xf32, #tpu.memory_space<vmem>>, vector<1x1x24xf32>
    %6 = vector.shape_cast %5 : vector<1x1x24xf32> to vector<1x24xf32>
    %7 = vector.broadcast %6 : vector<1x24xf32> to vector<8x24xf32>
    %8 = arith.addf %4, %7 : vector<8x24xf32>
    %9 = vector.extract_strided_slice %8 {offsets = [0, 0], sizes = [8, 8], strides = [1, 1]} : vector<8x24xf32> to vector<8x8xf32>
    %c0_8 = arith.constant 0 : index
    %c0_9 = arith.constant 0 : index
    %c0_10 = arith.constant 0 : index
    %c0_11 = arith.constant 0 : index
    %10 = vector.load %arg6[%c0_8, %c0_9, %c0_10, %c0_11] : memref<1x1x8x8xf32, #tpu.memory_space<vmem>>, vector<1x1x8x8xf32>
    %11 = vector.shape_cast %10 : vector<1x1x8x8xf32> to vector<8x8xf32>
    %12 = vector.shape_cast %9 : vector<8x8xf32> to vector<1x1x8x8xf32>
    tpu.vector_store %arg6[%c0_8, %c0_9, %c0_10, %c0_11], %12 {strides = array<i32>} : memref<1x1x8x8xf32, #tpu.memory_space<vmem>>, vector<1x1x8x8xf32>,
    %13 = vector.extract_strided_slice %8 {offsets = [0, 8], sizes = [8, 8], strides = [1, 1]} : vector<8x24xf32> to vector<8x8xf32>
    %c0_12 = arith.constant 0 : index
    %c0_13 = arith.constant 0 : index
    %c0_14 = arith.constant 0 : index
    %c0_15 = arith.constant 0 : index
    %14 = vector.load %arg7[%c0_12, %c0_13, %c0_14, %c0_15] : memref<1x1x8x8xf32, #tpu.memory_space<vmem>>, vector<1x1x8x8xf32>
    %15 = vector.shape_cast %14 : vector<1x1x8x8xf32> to vector<8x8xf32>
    %16 = vector.shape_cast %13 : vector<8x8xf32> to vector<1x1x8x8xf32>
    tpu.vector_store %arg7[%c0_12, %c0_13, %c0_14, %c0_15], %16 {strides = array<i32>} : memref<1x1x8x8xf32, #tpu.memory_space<vmem>>, vector<1x1x8x8xf32>,
    %17 = vector.extract_strided_slice %8 {offsets = [0, 16], sizes = [8, 8], strides = [1, 1]} : vector<8x24xf32> to vector<8x8xf32>
    %c0_16 = arith.constant 0 : index
    %c0_17 = arith.constant 0 : index
    %c0_18 = arith.constant 0 : index
    %c0_19 = arith.constant 0 : index
    %18 = vector.load %arg8[%c0_16, %c0_17, %c0_18, %c0_19] : memref<1x1x8x8xf32, #tpu.memory_space<vmem>>, vector<1x1x8x8xf32>
    %19 = vector.shape_cast %18 : vector<1x1x8x8xf32> to vector<8x8xf32>
    %20 = vector.shape_cast %17 : vector<8x8xf32> to vector<1x1x8x8xf32>
    tpu.vector_store %arg8[%c0_16, %c0_17, %c0_18, %c0_19], %20 {strides = array<i32>} : memref<1x1x8x8xf32, #tpu.memory_space<vmem>>, vector<1x1x8x8xf32>,
    return
  }
  func.func @transform_0(%arg0: i32, %arg1: i32, %arg2: i32) -> (i32, i32, i32) {
    %c0_i32 = arith.constant 0 : i32
    %c0_i32_0 = arith.constant 0 : i32
    return %arg0, %arg2, %c0_i32 : i32, i32, i32
  }
  func.func @transform_1(%arg0: i32, %arg1: i32, %arg2: i32) -> (i32, i32, i32) {
    %c0_i32 = arith.constant 0 : i32
    %c0_i32_0 = arith.constant 0 : i32
    %c0_i32_1 = arith.constant 0 : i32
    return %arg1, %c0_i32, %c0_i32_0 : i32, i32, i32
  }
  func.func @transform_2(%arg0: i32, %arg1: i32, %arg2: i32) -> (i32, i32, i32) {
    %c0_i32 = arith.constant 0 : i32
    %c0_i32_0 = arith.constant 0 : i32
    %c0_i32_1 = arith.constant 0 : i32
    return %arg1, %c0_i32, %c0_i32_0 : i32, i32, i32
  }
  func.func @transform_3(%arg0: i32, %arg1: i32, %arg2: i32) -> (i32, i32, i32, i32) {
    %c0_i32 = arith.constant 0 : i32
    %c0_i32_0 = arith.constant 0 : i32
    return %arg0, %arg1, %arg2, %c0_i32 : i32, i32, i32, i32
  }
  func.func @transform_4(%arg0: i32, %arg1: i32, %arg2: i32) -> (i32, i32, i32, i32) {
    %c0_i32 = arith.constant 0 : i32
    %c0_i32_0 = arith.constant 0 : i32
    return %arg0, %arg1, %arg2, %c0_i32 : i32, i32, i32, i32
  }
  func.func @transform_5(%arg0: i32, %arg1: i32, %arg2: i32) -> (i32, i32, i32, i32) {
    %c0_i32 = arith.constant 0 : i32
    %c0_i32_0 = arith.constant 0 : i32
    return %arg0, %arg1, %arg2, %c0_i32 : i32, i32, i32, i32
  }
}

</mosaic_0001>

<llo_original>
// kernel: tpu_custom_call.1
$region0: #{tpu_custom_call.1}
  #allocation0 [shape = 'u32[]', space=smem, size = 0x4, offset = 0x4, fixed_abs, tag = 'smem constant byte address 0x4 - core index']
  #allocation1 [shape = 'u32[144,128]{1,0:T(1,128)}', space=vmem, size = 0x12000, scoped, tag = 'internal scratch']
  %s0 = inlined_call_operand.vmem [shape: f32[2,8,32], index: 0, kind: input, shape index: {}]
  %s1 = inlined_call_operand.vmem [shape: f32[4,32,24], index: 1, kind: input, shape index: {}]
  %s2 = inlined_call_operand.vmem [shape: f32[4,1,24], index: 2, kind: input, shape index: {}]
  %s3 = inlined_call_operand.hbm [shape: f32[2,4,8,8], index: 3, kind: output, shape index: {0}]
  %s4 = inlined_call_operand.hbm [shape: f32[2,4,8,8], index: 4, kind: output, shape index: {1}]
  %s5 = inlined_call_operand.hbm [shape: f32[2,4,8,8], index: 5, kind: output, shape index: {2}]
  %6 = xla_tuple %s3, %s4, %s5
  %s7 = sld [smem:[#allocation0]]
  $region61: #{tpu_custom_call.1} parent=0
    _
  %s9 = ssub.s32 1, %s7
  %s10 = scalar_select 0, %s9, %s7
  $region1: #{tpu_custom_call.1} parent=0
    #allocation2 [shape = 'u8[8192]{0}', space=vmem, size = 0x2000, scoped, tag = 'output window, operand 0']
    #allocation3 [shape = 's32[2]{0}', space=sflag, size = 0x8, scoped, tag = 'scoped memory for tpu_custom_call.1']
    #allocation4 [shape = 'u8[8192]{0}', space=vmem, size = 0x2000, scoped, tag = 'output window, operand 1']
    #allocation5 [shape = 's32[2]{0}', space=sflag, size = 0x8, scoped, tag = 'scoped memory for tpu_custom_call.1']
    #allocation6 [shape = 'u8[8192]{0}', space=vmem, size = 0x2000, scoped, tag = 'output window, operand 2']
    %11 = vsyncpa [#allocation3], 0
    %s12 = scalar_lea.sflag [#allocation3], 1
    %13 = vsyncpa %s12, 0
    %14 = vsyncpa [#allocation5], 0
    %s15 = scalar_lea.sflag [#allocation5], 1
    %16 = vsyncpa %s15, 0
    loop: start=0, step=1, limit=10
    $region2: #{tpu_custom_call.1} parent=1 // loop_pre_header
      _
    $region3: #{tpu_custom_call.1} parent=1 // loop_header
      %s18 = sphi 0, %s22
      %p19 = scmp.ge.s32.totalorder %s18, 10
      %s25 = sphi 0, %s44
      %s26 = sphi 0, %s40
      %s27 = sphi 0, %s36
      %s28 = sphi 0, %s25
      %s29 = sphi 0, %s26
      %s30 = sphi 0, %s27
      %s31 = sphi 0, %s28
      %s32 = sphi 0, %s29
      %s33 = sphi 0, %s30
      %s49 = sphi 0, %s51
      %s52 = sphi 0, %s49
      %s53 = sphi 0, %s52
      %s69 = sphi 0, %s53
      %s75 = sphi 0, %s77
      %s78 = sphi 0, %s75
      %s79 = sphi 0, %s78
      %s95 = sphi 0, %s79
      %s101 = sphi 0, %s103
      %s104 = sphi 0, %s101
      %s105 = sphi 0, %s104
      %s121 = sphi 0, %s105
      %s131 = sphi 0, %s133
      %s134 = sphi 0, %s131
      %s135 = sphi 0, %s134
      %s151 = sphi 0, %s135
      %s161 = sphi 0, %s163
      %s164 = sphi 0, %s161
      %s165 = sphi 0, %s164
      %s181 = sphi 0, %s165
      %s191 = sphi 0, %s193
      %s194 = sphi 0, %s191
      %s195 = sphi 0, %s194
      %s211 = sphi 0, %s195
    $region4: #{tpu_custom_call.1} parent=1 // loop_header_branch
      %21 = sbr.rel (%p19) target = $region8
    $region5: #{tpu_custom_call.1} parent=1 // loop_body
      %s23 = ssub.s32 %s18, 1
      %s24 = ssub.s32 %s18, 2
      %s34 = sadd.s32 1, %s27
      %p35 = scmp.ge.s32.totalorder %s34, 1
      %s36 = scalar_select %p35, 0, %s34
      %s37 = sadd.s32 1, %s26
      %s38 = scalar_select %p35, %s37, %s26
      %p39 = scmp.ge.s32.totalorder %s38, 4
      %s40 = scalar_select %p39, 0, %s38
      %s41 = sadd.s32 1, %s25
      %s42 = scalar_select %p39, %s41, %s25
      %p43 = scmp.ge.s32.totalorder %s42, 2
      %s44 = scalar_select %p43, 0, %s42
      %s45 = ssub.s32 %s25, %s44
      %s46 = ssub.s32 %s27, %s36
      %s47 = sor.u32 %s45, %s46
      %p48 = scmp.eq.s32.totalorder %s47, 0
      %s50 = sadd.s32 %s49, 1
      %s51 = scalar_select %p48, %s49, %s50
      %p54 = pneg %p48
      %p55 = scmp.eq.s32.totalorder %s18, 7
      %p56 = por %p54, %p55
      %p57 = scmp.ne.s32.totalorder %s49, %s52
      %p58 = scmp.eq.s32.totalorder %s18, 0
      %p59 = por %p57, %p58
      %p60 = scmp.ne.s32.totalorder %s49, %s52
      %p61 = scmp.eq.s32.totalorder %s23, 7
      %p62 = por %p60, %p61
      %p63 = scmp.ne.s32.totalorder %s52, %s53
      %p64 = scmp.eq.s32.totalorder %s23, 0
      %p65 = por %p63, %p64
      %p66 = scmp.ne.s32.totalorder %s52, %s53
      %p67 = scmp.eq.s32.totalorder %s24, 7
      %p68 = por %p66, %p67
      %p70 = scmp.ne.s32.totalorder %s53, %s69
      %p71 = scmp.eq.s32.totalorder %s24, 0
      %p72 = por %p70, %p71
      %s73 = ssub.s32 %s26, %s40
      %p74 = scmp.eq.s32.totalorder %s73, 0
      %s76 = sadd.s32 %s75, 1
      %s77 = scalar_select %p74, %s75, %s76
      %p80 = pneg %p74
      %p81 = scmp.eq.s32.totalorder %s18, 7
      %p82 = por %p80, %p81
      %p83 = scmp.ne.s32.totalorder %s75, %s78
      %p84 = scmp.eq.s32.totalorder %s18, 0
      %p85 = por %p83, %p84
      %p86 = scmp.ne.s32.totalorder %s75, %s78
      %p87 = scmp.eq.s32.totalorder %s23, 7
      %p88 = por %p86, %p87
      %p89 = scmp.ne.s32.totalorder %s78, %s79
      %p90 = scmp.eq.s32.totalorder %s23, 0
      %p91 = por %p89, %p90
      %p92 = scmp.ne.s32.totalorder %s78, %s79
      %p93 = scmp.eq.s32.totalorder %s24, 7
      %p94 = por %p92, %p93
      %p96 = scmp.ne.s32.totalorder %s79, %s95
      %p97 = scmp.eq.s32.totalorder %s24, 0
      %p98 = por %p96, %p97
      %s99 = ssub.s32 %s26, %s40
      %p100 = scmp.eq.s32.totalorder %s99, 0
      %s102 = sadd.s32 %s101, 1
      %s103 = scalar_select %p100, %s101, %s102
      %p106 = pneg %p100
      %p107 = scmp.eq.s32.totalorder %s18, 7
      %p108 = por %p106, %p107
      %p109 = scmp.ne.s32.totalorder %s101, %s104
      %p110 = scmp.eq.s32.totalorder %s18, 0
      %p111 = por %p109, %p110
      %p112 = scmp.ne.s32.totalorder %s101, %s104
      %p113 = scmp.eq.s32.totalorder %s23, 7
      %p114 = por %p112, %p113
      %p115 = scmp.ne.s32.totalorder %s104, %s105
      %p116 = scmp.eq.s32.totalorder %s23, 0
      %p117 = por %p115, %p116
      %p118 = scmp.ne.s32.totalorder %s104, %s105
      %p119 = scmp.eq.s32.totalorder %s24, 7
      %p120 = por %p118, %p119
      %p122 = scmp.ne.s32.totalorder %s105, %s121
      %p123 = scmp.eq.s32.totalorder %s24, 0
      %p124 = por %p122, %p123
      %s125 = ssub.s32 %s25, %s44
      %s126 = ssub.s32 %s26, %s40
      %s127 = sor.u32 %s125, %s126
      %s128 = ssub.s32 %s27, %s36
      %s129 = sor.u32 %s127, %s128
      %p130 = scmp.eq.s32.totalorder %s129, 0
      %s132 = sadd.s32 %s131, 1
      %s133 = scalar_select %p130, %s131, %s132
      %p136 = pneg %p130
      %p137 = scmp.eq.s32.totalorder %s18, 7
      %p138 = por %p136, %p137
      %p139 = scmp.ne.s32.totalorder %s131, %s134
      %p140 = scmp.eq.s32.totalorder %s18, 0
      %p141 = por %p139, %p140
      %p142 = scmp.ne.s32.totalorder %s131, %s134
      %p143 = scmp.eq.s32.totalorder %s23, 7
      %p144 = por %p142, %p143
      %p145 = scmp.ne.s32.totalorder %s134, %s135
      %p146 = scmp.eq.s32.totalorder %s23, 0
      %p147 = por %p145, %p146
      %p148 = scmp.ne.s32.totalorder %s134, %s135
      %p149 = scmp.eq.s32.totalorder %s24, 7
      %p150 = por %p148, %p149
      %p152 = scmp.ne.s32.totalorder %s135, %s151
      %p153 = scmp.eq.s32.totalorder %s24, 0
      %p154 = por %p152, %p153
      %s155 = ssub.s32 %s25, %s44
      %s156 = ssub.s32 %s26, %s40
      %s157 = sor.u32 %s155, %s156
      %s158 = ssub.s32 %s27, %s36
      %s159 = sor.u32 %s157, %s158
      %p160 = scmp.eq.s32.totalorder %s159, 0
      %s162 = sadd.s32 %s161, 1
      %s163 = scalar_select %p160, %s161, %s162
      %p166 = pneg %p160
      %p167 = scmp.eq.s32.totalorder %s18, 7
      %p168 = por %p166, %p167
      %p169 = scmp.ne.s32.totalorder %s161, %s164
      %p170 = scmp.eq.s32.totalorder %s18, 0
      %p171 = por %p169, %p170
      %p172 = scmp.ne.s32.totalorder %s161, %s164
      %p173 = scmp.eq.s32.totalorder %s23, 7
      %p174 = por %p172, %p173
      %p175 = scmp.ne.s32.totalorder %s164, %s165
      %p176 = scmp.eq.s32.totalorder %s23, 0
      %p177 = por %p175, %p176
      %p178 = scmp.ne.s32.totalorder %s164, %s165
      %p179 = scmp.eq.s32.totalorder %s24, 7
      %p180 = por %p178, %p179
      %p182 = scmp.ne.s32.totalorder %s165, %s181
      %p183 = scmp.eq.s32.totalorder %s24, 0
      %p184 = por %p182, %p183
      %s185 = ssub.s32 %s25, %s44
      %s186 = ssub.s32 %s26, %s40
      %s187 = sor.u32 %s185, %s186
      %s188 = ssub.s32 %s27, %s36
      %s189 = sor.u32 %s187, %s188
      %p190 = scmp.eq.s32.totalorder %s189, 0
      %s192 = sadd.s32 %s191, 1
      %s193 = scalar_select %p190, %s191, %s192
      %p196 = pneg %p190
      %p197 = scmp.eq.s32.totalorder %s18, 7
      %p198 = por %p196, %p197
      %p199 = scmp.ne.s32.totalorder %s191, %s194
      %p200 = scmp.eq.s32.totalorder %s18, 0
      %p201 = por %p199, %p200
      %p202 = scmp.ne.s32.totalorder %s191, %s194
      %p203 = scmp.eq.s32.totalorder %s23, 7
      %p204 = por %p202, %p203
      %p205 = scmp.ne.s32.totalorder %s194, %s195
      %p206 = scmp.eq.s32.totalorder %s23, 0
      %p207 = por %p205, %p206
      %p208 = scmp.ne.s32.totalorder %s194, %s195
      %p209 = scmp.eq.s32.totalorder %s24, 7
      %p210 = por %p208, %p209
      %p212 = scmp.ne.s32.totalorder %s195, %s211
      %p213 = scmp.eq.s32.totalorder %s24, 0
      %p214 = por %p212, %p213
      %p215 = scmp.le.s32.totalorder 1, %s18
      %p216 = scmp.lt.s32.totalorder %s18, 9
      %p217 = pnand %p215, %p216
      %p218 = pneg %p217
      // Predicated region
      $region9: #{tpu_custom_call.1} parent=5 // pred_check
        _
      $region10: #{tpu_custom_call.1} parent=5 // pred_check_branch
        %220 = sbr.rel (%p217) target = $region12
      $region11: #{tpu_custom_call.1} parent=5 // pred_region
        %s221 = ssub.s32 %s18, 1
      $region12: #{tpu_custom_call.1} parent=5 // pred_fallthru
        _
      %p222 = scmp.lt.s32.totalorder %s18, 8
      // Predicated region
      $region13: #{tpu_custom_call.1} parent=5 // pred_check
        %p223 = pneg %p222
      $region14: #{tpu_custom_call.1} parent=5 // pred_check_branch
        %225 = sbr.rel (%p223) target = $region16
      $region15: #{tpu_custom_call.1} parent=5 // pred_region
        // Predicated region
        $region17: #{tpu_custom_call.1} parent=15 // pred_check
          %p226 = pneg %p59
        $region18: #{tpu_custom_call.1} parent=15 // pred_check_branch
          %228 = sbr.rel (%p226) target = $region20
        $region19: #{tpu_custom_call.1} parent=15 // pred_region
          %p229 = scmp.lt.s32.totalorder %s25, 1
          %s230 = scalar_select %p229, %s25, 1
          %p231 = scmp.lt.s32.totalorder %s27, 0
          %s232 = scalar_select %p231, %s27, 0
          %s233 = sadd.s32 %s232, %s230
          %s234 = smul.addr %s233, 8
          %s235 = scalar_lea.vmem %s0, %s234
        $region20: #{tpu_custom_call.1} parent=15 // pred_fallthru
          _
        // Predicated region
        $region21: #{tpu_custom_call.1} parent=15 // pred_check
          %p236 = pneg %p85
        $region22: #{tpu_custom_call.1} parent=15 // pred_check_branch
          %238 = sbr.rel (%p236) target = $region24
        $region23: #{tpu_custom_call.1} parent=15 // pred_region
          %p239 = scmp.lt.s32.totalorder %s26, 3
          %s240 = scalar_select %p239, %s26, 3
          %s241 = smul.addr %s240, 4
          %s242 = smul.addr %s241, 8
          %s243 = scalar_lea.vmem %s1, %s242
        $region24: #{tpu_custom_call.1} parent=15 // pred_fallthru
          _
        // Predicated region
        $region25: #{tpu_custom_call.1} parent=15 // pred_check
          %p244 = pneg %p111
        $region26: #{tpu_custom_call.1} parent=15 // pred_check_branch
          %246 = sbr.rel (%p244) target = $region28
        $region27: #{tpu_custom_call.1} parent=15 // pred_region
          %p247 = scmp.lt.s32.totalorder %s26, 3
          %s248 = scalar_select %p247, %s26, 3
          %s249 = scalar_lea.vmem %s2, %s248
        $region28: #{tpu_custom_call.1} parent=15 // pred_fallthru
          _
      $region16: #{tpu_custom_call.1} parent=5 // pred_fallthru
        _
      %p250 = scmp.le.s32.totalorder 1, %s18
      %p251 = scmp.lt.s32.totalorder %s18, 9
      %p252 = pnand %p250, %p251
      %p253 = pneg %p252
      // Predicated region
      $region29: #{tpu_custom_call.1} parent=5 // pred_check
        _
      $region30: #{tpu_custom_call.1} parent=5 // pred_check_branch
        %255 = sbr.rel (%p252) target = $region32
      $region31: #{tpu_custom_call.1} parent=5 // pred_region
        %s256 = ssub.s32 %s18, 1
        %p257 = scmp.lt.s32.totalorder %s28, 1
        %s258 = scalar_select %p257, %s28, 1
        %p259 = scmp.lt.s32.totalorder %s30, 0
        %s260 = scalar_select %p259, %s30, 0
        %s261 = sadd.s32 %s260, %s258
        %s262 = smul.addr %s261, 8
        %s263 = scalar_lea.vmem %s0, %s262
        %p264 = pneg %p65
        %p265 = pneg %p62
        %p266 = scmp.lt.s32.totalorder %s29, 3
        %s267 = scalar_select %p266, %s29, 3
        %s268 = smul.addr %s267, 4
        %s269 = smul.addr %s268, 8
        %s270 = scalar_lea.vmem %s1, %s269
        %p271 = pneg %p91
        %p272 = pneg %p88
        %p273 = scmp.lt.s32.totalorder %s29, 3
        %s274 = scalar_select %p273, %s29, 3
        %s275 = scalar_lea.vmem %s2, %s274
        %p276 = pneg %p117
        %p277 = pneg %p114
        %p278 = pneg %p147
        %p279 = pneg %p144
        %s280 = sand.u32 %s134, 1
        %s281 = scalar_lea.sflag [#allocation3], %s280
        %s282 = sand.u32 %s134, 1
        %s283 = smul.addr %s282, 8
        %s284 = scalar_lea.vmem [#allocation2], %s283
        %p285 = pneg %p177
        %p286 = pneg %p174
        %s287 = sand.u32 %s23, 1
        %s288 = scalar_lea.sflag [#allocation5], %s287
        %s289 = sand.u32 %s164, 1
        %s290 = smul.addr %s289, 8
        %s291 = scalar_lea.vmem [#allocation4], %s290
        %p292 = pneg %p207
        %p293 = pneg %p204
        %s294 = sand.u32 %s23, 1
        %s295 = scalar_lea.sflag [#allocation5], %s294
        %s296 = sand.u32 %s194, 1
        %s297 = smul.addr %s296, 8
        %s298 = scalar_lea.vmem [#allocation6], %s297
        %p299 = scmp.lt.s32.totalorder %s28, 1
        %s300 = scalar_select %p299, %s28, 1
        %p301 = scmp.lt.s32.totalorder %s30, 0
        %s302 = scalar_select %p301, %s30, 0
        %s303 = sadd.s32 %s302, %s300
        %s304 = smul.addr %s303, 8
        %s305 = scalar_lea.vmem %s0, %s304
        %p306 = scmp.lt.s32.totalorder %s29, 3
        %s307 = scalar_select %p306, %s29, 3
        %s308 = smul.addr %s307, 4
        %s309 = smul.addr %s308, 8
        %s310 = scalar_lea.vmem %s1, %s309
        %p311 = scmp.lt.s32.totalorder %s29, 3
        %s312 = scalar_select %p311, %s29, 3
        %s313 = scalar_lea.vmem %s2, %s312
        %v314 = vld [vmem:[%s305] sm:$0xff]
        %v315 = vld [vmem:[%s310] sm:$0xff]
        %v316 = vld [vmem:[%s310 + $0x8] sm:$0xff]
        %v317 = vld [vmem:[%s310 + $0x10] sm:$0xff]
        %v318 = vld [vmem:[%s310 + $0x18] sm:$0xff]
        %v319 = vld [vmem:[%s313] sm:$0x1]
        %v321 = vlaneseq
        %v322 = vshrl.u32 %v321, 7
        %v323 = vsub.s32 0, %v322
        %v324 = vrot.slane %v319, %v323
        %vm326 = vcmask 261120
        %v328 = vsel %vm326, %v314, 0
        %330 = vmatprep.subr.mxu0 0.0
        %331 = vmatpush1.msra.mxu0 0.0
        %332 = vmatprep.subr.mxu0 0.0
        %333 = vmatpush1.msra.mxu0 0.0
        %334 = vmatprep.subr.mxu0 0.0
        %335 = vmatpush1.msra.mxu0 0.0
        %336 = vmatprep.subr.mxu0 0.0
        %337 = vmatpush1.msra.mxu0 0.0
        %338 = vmatprep.subr.mxu0 0.0
        %339 = vmatpush1.msra.mxu0 0.0
        %340 = vmatprep.subr.mxu0 0.0
        %341 = vmatpush1.msra.mxu0 0.0
        %342 = vmatprep.subr.mxu0 0.0
        %343 = vmatpush1.msra.mxu0 0.0
        %344 = vmatprep.subr.mxu0 0.0
        %345 = vmatpush1.msra.mxu0 0.0
        %346 = vmatprep.subr.mxu0 0.0
        %347 = vmatpush1.msra.mxu0 0.0
        %348 = vmatprep.subr.mxu0 0.0
        %349 = vmatpush1.msra.mxu0 0.0
        %350 = vmatprep.subr.mxu0 0.0
        %351 = vmatpush1.msra.mxu0 0.0
        %352 = vmatprep.subr.mxu0 0.0
        %353 = vmatpush1.msra.mxu0 0.0
        %354 = vmatprep.subr.mxu0 0.0
        %355 = vmatpush1.msra.mxu0 %v318
        %356 = vmatprep.subr.mxu0 0.0
        %357 = vmatpush1.msra.mxu0 %v317
        %358 = vmatprep.subr.mxu0 0.0
        %359 = vmatpush1.msra.mxu0 %v316
        %360 = vmatprep.subr.mxu0 0.0
        %361 = vmatpush1.msra.mxu0 %v315
        %362 = vmatprep.subr.mxu0 0.0
        %363 = vmatpush2.msra.mxu0 0.0
        %364 = vmatprep.subr.mxu0 0.0
        %365 = vmatpush2.msra.mxu0 0.0
        %366 = vmatprep.subr.mxu0 0.0
        %367 = vmatpush2.msra.mxu0 0.0
        %368 = vmatprep.subr.mxu0 0.0
        %369 = vmatpush2.msra.mxu0 0.0
        %370 = vmatprep.subr.mxu0 0.0
        %371 = vmatpush2.msra.mxu0 0.0
        %372 = vmatprep.subr.mxu0 0.0
        %373 = vmatpush2.msra.mxu0 0.0
        %374 = vmatprep.subr.mxu0 0.0
        %375 = vmatpush2.msra.mxu0 0.0
        %376 = vmatprep.subr.mxu0 0.0
        %377 = vmatpush2.msra.mxu0 0.0
        %378 = vmatprep.subr.mxu0 0.0
        %379 = vmatpush2.msra.mxu0 0.0
        %380 = vmatprep.subr.mxu0 0.0
        %381 = vmatpush2.msra.mxu0 0.0
        %382 = vmatprep.subr.mxu0 0.0
        %383 = vmatpush2.msra.mxu0 0.0
        %384 = vmatprep.subr.mxu0 0.0
        %385 = vmatpush2.msra.mxu0 0.0
        %386 = vmatprep.subr.mxu0 0.0
        %387 = vmatpush2.msra.mxu0 0.0
        %388 = vmatprep.subr.mxu0 0.0
        %389 = vmatpush2.msra.mxu0 0.0
        %390 = vmatprep.subr.mxu0 0.0
        %391 = vmatpush2.msra.mxu0 0.0
        %392 = vmatprep.subr.mxu0 0.0
        %393 = vmatpush2.msra.mxu0 0.0
        %394 = vmatprep.mubr.f32.mxu0 0.0
        %395 = vmatmul.mubr.f32.gmra.mxu0 %v328
        %v396 = vpop.f32.mrf.mxu0
        %v397 = vadd.f32 %v324, %v396
        %v398 = vpop.f32.mrf.mxu0
        %399 = vdwg.mxu0
        %vm400 = vcmask 64512
        %401 = vst.msk [vmem:[%s284] sm:$0xff] %vm400, %v397
        %403 = vrot.lane.b32.xlu0 %v397, 120
        %v404 = vpop.permute.xlu0 %403
        %406 = vst.msk [vmem:[%s291] sm:$0xff] %vm400, %v404
        %407 = vrot.lane.b32.xlu0 %v397, 112
        %v408 = vpop.permute.xlu0 %407
        %410 = vst.msk [vmem:[%s298] sm:$0xff] %vm400, %v408
        %s411 = sand.u32 %s134, 1
        %s412 = scalar_lea.sflag [#allocation3], %s411
        %s413 = sand.u32 %s134, 1
        %s414 = smul.addr %s413, 8
        %s415 = scalar_lea.vmem [#allocation2], %s414
        %s416 = sand.u32 %s23, 1
        %s417 = scalar_lea.sflag [#allocation5], %s416
        %s418 = sand.u32 %s164, 1
        %s419 = smul.addr %s418, 8
        %s420 = scalar_lea.vmem [#allocation4], %s419
        %s421 = sand.u32 %s23, 1
        %s422 = scalar_lea.sflag [#allocation5], %s421
        %s423 = sand.u32 %s194, 1
        %s424 = smul.addr %s423, 8
        %s425 = scalar_lea.vmem [#allocation6], %s424
        // Predicated region
        $region33: #{tpu_custom_call.1} parent=31 // pred_check
          %p426 = pneg %p144
        $region34: #{tpu_custom_call.1} parent=31 // pred_check_branch
          %428 = sbr.rel (%p426) target = $region36
        $region35: #{tpu_custom_call.1} parent=31 // pred_region
          %s430 = ssub.s32 128, 128
          %431 = vsyncadd %s412, %s430
          %s432 = sadd.s32 %s30, %s29
          %s433 = smul.addr %s28, 4
          %s434 = sadd.s32 %s432, %s433
          %s435 = smul.addr %s434, 128
          %s436 = scalar_lea.hbm %s3, %s435
          %s438 = sshll.u32 %s415, 4
          %s439 = int_to_ptr.vmem [resolvable:$true] %s438
          %441 = dma.vmem_to_hbm [thread:$0]  %s439, 128, %s436, %s412
        $region36: #{tpu_custom_call.1} parent=31 // pred_fallthru
          _
        // Predicated region
        $region37: #{tpu_custom_call.1} parent=31 // pred_check
          %p442 = pneg %p174
        $region38: #{tpu_custom_call.1} parent=31 // pred_check_branch
          %444 = sbr.rel (%p442) target = $region40
        $region39: #{tpu_custom_call.1} parent=31 // pred_region
          %s446 = ssub.s32 128, 128
          %447 = vsyncadd %s417, %s446
          %s448 = sadd.s32 %s30, %s29
          %s449 = smul.addr %s28, 4
          %s450 = sadd.s32 %s448, %s449
          %s451 = smul.addr %s450, 128
          %s452 = scalar_lea.hbm %s4, %s451
          %s454 = sshll.u32 %s420, 4
          %s455 = int_to_ptr.vmem [resolvable:$true] %s454
          %457 = dma.vmem_to_hbm [thread:$0]  %s455, 128, %s452, %s417
        $region40: #{tpu_custom_call.1} parent=31 // pred_fallthru
          _
        // Predicated region
        $region41: #{tpu_custom_call.1} parent=31 // pred_check
          %p458 = pneg %p204
        $region42: #{tpu_custom_call.1} parent=31 // pred_check_branch
          %460 = sbr.rel (%p458) target = $region44
        $region43: #{tpu_custom_call.1} parent=31 // pred_region
          %s462 = ssub.s32 128, 128
          %463 = vsyncadd %s422, %s462
          %s464 = sadd.s32 %s30, %s29
          %s465 = smul.addr %s28, 4
          %s466 = sadd.s32 %s464, %s465
          %s467 = smul.addr %s466, 128
          %s468 = scalar_lea.hbm %s5, %s467
          %s470 = sshll.u32 %s425, 4
          %s471 = int_to_ptr.vmem [resolvable:$true] %s470
          %473 = dma.vmem_to_hbm [thread:$0]  %s471, 128, %s468, %s422
        $region44: #{tpu_custom_call.1} parent=31 // pred_fallthru
          _
      $region32: #{tpu_custom_call.1} parent=5 // pred_fallthru
        _
      %p474 = scmp.le.s32.totalorder 2, %s18
      // Predicated region
      $region45: #{tpu_custom_call.1} parent=5 // pred_check
        %p475 = pneg %p474
      $region46: #{tpu_custom_call.1} parent=5 // pred_check_branch
        %477 = sbr.rel (%p475) target = $region48
      $region47: #{tpu_custom_call.1} parent=5 // pred_region
        %s478 = ssub.s32 %s18, 2
        // Predicated region
        $region49: #{tpu_custom_call.1} parent=47 // pred_check
          %p479 = pneg %p150
        $region50: #{tpu_custom_call.1} parent=47 // pred_check_branch
          %481 = sbr.rel (%p479) target = $region52
        $region51: #{tpu_custom_call.1} parent=47 // pred_region
          %s482 = sand.u32 %s135, 1
          %s483 = scalar_lea.sflag [#allocation3], %s482
          %s484 = sand.u32 %s135, 1
          %s485 = smul.addr %s484, 8
          %s486 = scalar_lea.vmem [#allocation2], %s485
          %487 = dma.done %s483, 128
        $region52: #{tpu_custom_call.1} parent=47 // pred_fallthru
          _
        // Predicated region
        $region53: #{tpu_custom_call.1} parent=47 // pred_check
          %p488 = pneg %p180
        $region54: #{tpu_custom_call.1} parent=47 // pred_check_branch
          %490 = sbr.rel (%p488) target = $region56
        $region55: #{tpu_custom_call.1} parent=47 // pred_region
          %s491 = sand.u32 %s24, 1
          %s492 = scalar_lea.sflag [#allocation5], %s491
          %s493 = sand.u32 %s165, 1
          %s494 = smul.addr %s493, 8
          %s495 = scalar_lea.vmem [#allocation4], %s494
          %496 = dma.done %s492, 128
        $region56: #{tpu_custom_call.1} parent=47 // pred_fallthru
          _
        // Predicated region
        $region57: #{tpu_custom_call.1} parent=47 // pred_check
          %p497 = pneg %p210
        $region58: #{tpu_custom_call.1} parent=47 // pred_check_branch
          %499 = sbr.rel (%p497) target = $region60
        $region59: #{tpu_custom_call.1} parent=47 // pred_region
          %s500 = sand.u32 %s24, 1
          %s501 = scalar_lea.sflag [#allocation5], %s500
          %s502 = sand.u32 %s195, 1
          %s503 = smul.addr %s502, 8
          %s504 = scalar_lea.vmem [#allocation6], %s503
          %505 = dma.done %s501, 128
        $region60: #{tpu_custom_call.1} parent=47 // pred_fallthru
          _
      $region48: #{tpu_custom_call.1} parent=5 // pred_fallthru
        _
    $region6: #{tpu_custom_call.1} parent=1 // loop_footer
      %s22 = sadd.s32 1, %s18
    $region7: #{tpu_custom_call.1} parent=1 // loop_footer_branch
      %17 = sbr.rel target = $region3
    $region8: #{tpu_custom_call.1} parent=1 // loop_exit
      _
    %506 = vsyncpa [#allocation3], 1
    %s507 = scalar_lea.sflag [#allocation3], 1
    %508 = vsyncpa %s507, 1
    %509 = vsyncpa [#allocation5], 1
    %s510 = scalar_lea.sflag [#allocation5], 1
    %511 = vsyncpa %s510, 1

</llo_original>
